<compile_context>
chip_gen: v7x
topology: tpu7x:2x2x1
jax: 0.10.0
libtpu: 0.0.40
codegen_flags: <defaults>
</compile_context>

<pallas_src>
import math

import jax
import jax.numpy as jnp
from jax import lax
from jax.experimental import pallas as pl
from jax.experimental.pallas import tpu as pltpu


def _round_up(a, b):
    return (a + b - 1) // b * b


def _device_tuning():
    """Returns (tile_m, vmem_limit_bytes) for the current TPU generation."""
    try:
        kind = jax.devices()[0].device_kind.lower()
    except Exception:
        kind = ""
    if "v5 lite" in kind or "v5lite" in kind or "v5e" in kind:
        # v5e: MXU-bound at 197 TF/s, 128 MiB physical VMEM -> big tiles are free headroom.
        return 256, 96 * 1024 * 1024
    if "v6" in kind:
        # v6e: 2x256^2 MXU, 128 MiB physical VMEM (32 MiB scoped default).
        return 512, 96 * 1024 * 1024
    if "7" in kind:
        # v7x: 64 MiB VMEM per TC.  With Buffered(1) weights + H-chunking, 512-row
        # tiles fit comfortably under a 48 MiB budget even with f32 weights.
        return 512, 48 * 1024 * 1024
    return 256, None


def _make_kernel(d_valid, d_padded, h_padded, h_chunk, approx_gelu):
    """Fused LN + MLP kernel. d_valid is the true feature dim (LayerNorm statistics
    must ignore zero-padded lanes when d_padded > d_valid)."""
    need_mask = d_padded != d_valid
    inv_d = 1.0 / float(d_valid)
    inv_sqrt2 = 1.0 / math.sqrt(2.0)

    def kernel(x_ref, g_ref, bta_ref, w1_ref, b1_ref, w2_ref, b2_ref, o_ref, acc_ref):
        x = x_ref[...].astype(jnp.float32)                       # (TM, Dp)

        # --- LayerNorm over the valid lanes (eps = 1e-5) ---
        if need_mask:
            col = lax.broadcasted_iota(jnp.int32, (1, d_padded), 1)
            valid = (col < d_valid).astype(jnp.float32)          # (1, Dp)
            mean = jnp.sum(x, axis=-1, keepdims=True) * inv_d    # padded lanes are 0
            xc = (x - mean) * valid
        else:
            mean = jnp.mean(x, axis=-1, keepdims=True)
            xc = x - mean
        var = jnp.sum(xc * xc, axis=-1, keepdims=True) * inv_d
        # Fused LN epilogue, produced directly in the first-matmul operand dtype.
        xn = (xc * lax.rsqrt(var + 1e-5) * g_ref[...].astype(jnp.float32)
              + bta_ref[...].astype(jnp.float32)).astype(w1_ref.dtype)

        # --- MLP: y = GELU(xn @ W1 + b1) @ W2 + b2, hidden dim processed in chunks ---
        acc_ref[...] = jnp.broadcast_to(b2_ref[...].astype(jnp.float32), acc_ref.shape)
        # Statically unrolled chunk loop over 128-aligned static slices of the resident
        # weights; never materializes the full (TM, Hp) f32 intermediate.
        for h0 in range(0, h_padded, h_chunk):
            hs = min(h_chunk, h_padded - h0)
            hk = jnp.dot(xn, w1_ref[:, h0:h0 + hs],
                         preferred_element_type=jnp.float32)
            hk = hk + b1_ref[:, h0:h0 + hs].astype(jnp.float32)
            if approx_gelu:
                # tanh-based GELU -> transcendental lands in the EUP slot (free-ish).
                hk = jax.nn.gelu(hk, approximate=True)
            else:
                # Exact erf GELU (matches torch.nn.GELU() default semantics).
                hk = 0.5 * hk * (1.0 + lax.erf(hk * inv_sqrt2))
            # Dropout(p=0.0) is the identity -> nothing to do.
            acc_ref[...] += jnp.dot(hk.astype(w2_ref.dtype), w2_ref[h0:h0 + hs, :],
                                    preferred_element_type=jnp.float32)

        o_ref[...] = acc_ref[...].astype(o_ref.dtype)

    return kernel


def feedforward(x, gamma, beta, w1, b1, w2, b2, *, tile_m=None, hidden_chunk=512,
                gelu_approximate=True):
    """x: (B, S, D); w1: (D, H); w2: (H, D). Returns (B, S, D).

    gelu_approximate=True uses the tanh GELU (EUP-friendly, ~1e-3 max deviation from
    torch.nn.GELU()); pass False for exact-erf semantics.  When x is f32 but weights
    are bf16, the LayerNorm output is downcast to bf16 before the first matmul.
    """
    B, S, D = x.shape
    H = w1.shape[1]
    rows = B * S

    auto_tile, vmem_limit = _device_tuning()
    if tile_m is None:
        tile_m = auto_tile

    # Lane-dense padding (last dims multiples of 128) and row padding to a tile multiple.
    Dp = _round_up(D, 128)
    Hp = _round_up(H, 128)
    h_chunk = min(_round_up(hidden_chunk, 128), Hp)

    # tile_m: a multiple of 16 sublanes (bf16-safe), never grossly larger than rows.
    # NOTE: for small row counts the grid collapses to 1 step (no DMA/compute overlap);
    # acceptable for inference-sized inputs.
    tile_m = min(tile_m, _round_up(rows, 16))
    tile_m = max(16, (tile_m // 16) * 16)
    rows_p = _round_up(rows, tile_m)

    x2 = jnp.pad(x.reshape(rows, D), ((0, rows_p - rows), (0, Dp - D)))
    gp = jnp.pad(gamma, (0, Dp - D)).reshape(1, Dp)
    btp = jnp.pad(beta, (0, Dp - D)).reshape(1, Dp)
    w1p = jnp.pad(w1, ((0, Dp - D), (0, Hp - H)))
    b1p = jnp.pad(b1, (0, Hp - H)).reshape(1, Hp)
    w2p = jnp.pad(w2, ((0, Hp - H), (0, Dp - D)))
    b2p = jnp.pad(b2, (0, Dp - D)).reshape(1, Dp)

    grid = (rows_p // tile_m,)

    def const_spec(shape):
        # Constant block index across the whole grid -> single-buffer (no pointless
        # double-buffering of resident weights/biases).
        return pl.BlockSpec(shape, lambda i: (0, 0), pipeline_mode=pl.Buffered(1))

    out = pl.pallas_call(
        _make_kernel(D, Dp, Hp, h_chunk, gelu_approximate),
        out_shape=jax.ShapeDtypeStruct((rows_p, Dp), x.dtype),
        grid_spec=pltpu.PrefetchScalarGridSpec(
            num_scalar_prefetch=0,
            grid=grid,
            in_specs=[
                pl.BlockSpec((tile_m, Dp), lambda i: (i, 0)),   # x row tile (pipelined)
                const_spec((1, Dp)),        # LN gamma (resident)
                const_spec((1, Dp)),        # LN beta
                const_spec((Dp, Hp)),       # W1
                const_spec((1, Hp)),        # b1
                const_spec((Hp, Dp)),       # W2
                const_spec((1, Dp)),        # b2
            ],
            out_specs=pl.BlockSpec((tile_m, Dp), lambda i: (i, 0)),
            scratch_shapes=[pltpu.VMEM((tile_m, Dp), jnp.float32)],  # y accumulator
        ),
        compiler_params=pltpu.CompilerParams(
            dimension_semantics=("parallel",),
            vmem_limit_bytes=vmem_limit,
        ),
    )(x2, gp, btp, w1p, b1p, w2p, b2p)

    return out[:rows, :D].reshape(B, S, D)


def _reference(x, gamma, beta, w1, b1, w2, b2, *, approximate=False):
    xf = x.astype(jnp.float32)
    mean = jnp.mean(xf, axis=-1, keepdims=True)
    var = jnp.mean((xf - mean) ** 2, axis=-1, keepdims=True)
    xn = (xf - mean) / jnp.sqrt(var + 1e-5) * gamma.astype(jnp.float32) + beta.astype(jnp.float32)
    h = xn @ w1.astype(jnp.float32) + b1.astype(jnp.float32)
    h = jax.nn.gelu(h, approximate=approximate)
    return h @ w2.astype(jnp.float32) + b2.astype(jnp.float32)


if __name__ == "__main__":
    B, S, D, H = 2, 8, 32, 64   # batch, seq, dim, hidden_dim (small test shapes)

    key = jax.random.PRNGKey(0)
    kx, kg, kb, kw1, kb1, kw2, kb2 = jax.random.split(key, 7)

    x = jax.random.normal(kx, (B, S, D), dtype=jnp.float32)

    # Deterministic synthetic parameters (shapes match the nn.Module's layers).
    gamma = 1.0 + 0.1 * jax.random.normal(kg, (D,), dtype=jnp.float32)   # LayerNorm weight
    beta = 0.1 * jax.random.normal(kb, (D,), dtype=jnp.float32)          # LayerNorm bias
    lim1 = 1.0 / math.sqrt(D)
    w1 = jax.random.uniform(kw1, (D, H), minval=-lim1, maxval=lim1, dtype=jnp.float32)
    b1 = jax.random.uniform(kb1, (H,), minval=-lim1, maxval=lim1, dtype=jnp.float32)
    lim2 = 1.0 / math.sqrt(H)
    w2 = jax.random.uniform(kw2, (H, D), minval=-lim2, maxval=lim2, dtype=jnp.float32)
    b2 = jax.random.uniform(kb2, (D,), minval=-lim2, maxval=lim2, dtype=jnp.float32)

    ref_exact = _reference(x, gamma, beta, w1, b1, w2, b2, approximate=False)
    ref_tanh = _reference(x, gamma, beta, w1, b1, w2, b2, approximate=True)

    # 1) Exact-erf path (bit-matches torch.nn.GELU() default) in fp32.
    out_exact = feedforward(x, gamma, beta, w1, b1, w2, b2, gelu_approximate=False)
    out_exact = jax.block_until_ready(out_exact)
    assert out_exact.shape == (B, S, D)
    assert jnp.allclose(out_exact.astype(jnp.float32), ref_exact, atol=1e-4, rtol=1e-4), \
        "fp32 exact-GELU mismatch vs reference"

    # 2) Default (tanh-GELU, EUP-friendly) path in fp32.
    out = feedforward(x, gamma, beta, w1, b1, w2, b2)
    out = jax.block_until_ready(out)
    assert out.shape == (B, S, D)
    assert jnp.allclose(out.astype(jnp.float32), ref_tanh, atol=1e-4, rtol=1e-4), \
        "fp32 tanh-GELU mismatch vs matched reference"
    assert bool(jnp.max(jnp.abs(out.astype(jnp.float32) - ref_exact)) < 2e-2), \
        "tanh-GELU deviates too far from exact-GELU reference"

    # 3) bf16 activations + weights (exercises the no-upcast, MXU-native bf16 path).
    out_bf16 = feedforward(x.astype(jnp.bfloat16), gamma, beta,
                           w1.astype(jnp.bfloat16), b1,
                           w2.astype(jnp.bfloat16), b2)
    out_bf16 = jax.block_until_ready(out_bf16)
    assert out_bf16.shape == (B, S, D)
    assert bool(jnp.max(jnp.abs(out_bf16.astype(jnp.float32) - ref_exact)) < 0.1), \
        "bf16 mismatch vs reference"

    print("KERNEL_OK")
</pallas_src>

<mosaic_0001>
module attributes {stable_mosaic.version = 11 : i64} {
  func.func @kernel(%arg0: i32, %arg1: memref<16x128xf32, #tpu.memory_space<vmem>>, %arg2: memref<1x128xf32, #tpu.memory_space<vmem>>, %arg3: memref<1x128xf32, #tpu.memory_space<vmem>>, %arg4: memref<128x128xf32, #tpu.memory_space<vmem>>, %arg5: memref<1x128xf32, #tpu.memory_space<vmem>>, %arg6: memref<128x128xf32, #tpu.memory_space<vmem>>, %arg7: memref<1x128xf32, #tpu.memory_space<vmem>>, %arg8: memref<16x128xf32, #tpu.memory_space<vmem>>, %arg9: memref<16x128xf32, #tpu.memory_space<vmem>>) attributes {dimension_semantics = [#tpu.dimension_semantics<parallel>], iteration_bounds = array<i64: 1>, scalar_prefetch = 0 : i64, scratch_operands = 1 : i64, tpu.core_type = #tpu.core_type<tc>, window_params = [{transform_indices = @transform_0, window_bounds = array<i64: 16, 128>}, {pipeline_mode = #tpu.pipeline_mode<synchronous>, transform_indices = @transform_1, window_bounds = array<i64: 1, 128>}, {pipeline_mode = #tpu.pipeline_mode<synchronous>, transform_indices = @transform_2, window_bounds = array<i64: 1, 128>}, {pipeline_mode = #tpu.pipeline_mode<synchronous>, transform_indices = @transform_3, window_bounds = array<i64: 128, 128>}, {pipeline_mode = #tpu.pipeline_mode<synchronous>, transform_indices = @transform_4, window_bounds = array<i64: 1, 128>}, {pipeline_mode = #tpu.pipeline_mode<synchronous>, transform_indices = @transform_5, window_bounds = array<i64: 128, 128>}, {pipeline_mode = #tpu.pipeline_mode<synchronous>, transform_indices = @transform_6, window_bounds = array<i64: 1, 128>}, {transform_indices = @transform_7, window_bounds = array<i64: 16, 128>}]} {
    %c0 = arith.constant 0 : index
    %c0_0 = arith.constant 0 : index
    %0 = vector.load %arg1[%c0, %c0_0] : memref<16x128xf32, #tpu.memory_space<vmem>>, vector<16x128xf32>
    %1 = tpu.iota {dimensions = array<i32: 1>} : vector<1x128xi32>
    %c32_i32 = arith.constant 32 : i32
    %2 = vector.broadcast %c32_i32 : i32 to vector<1x128xi32>
    %3 = arith.cmpi slt, %1, %2 : vector<1x128xi32>
    %4 = arith.extui %3 : vector<1x128xi1> to vector<1x128xi32>
    %5 = arith.sitofp %4 : vector<1x128xi32> to vector<1x128xf32>
    %cst = arith.constant dense<0.000000e+00> : vector<16xf32>
    %6 = vector.multi_reduction <add>, %0, %cst [1] : vector<16x128xf32> to vector<16xf32>
    %7 = vector.shape_cast %6 : vector<16xf32> to vector<16x1xf32>
    %cst_1 = arith.constant 3.125000e-02 : f32
    %8 = vector.broadcast %cst_1 : f32 to vector<16x1xf32>
    %9 = arith.mulf %7, %8 : vector<16x1xf32>
    %10 = vector.broadcast %9 : vector<16x1xf32> to vector<16x128xf32>
    %11 = arith.subf %0, %10 : vector<16x128xf32>
    %12 = vector.broadcast %5 : vector<1x128xf32> to vector<16x128xf32>
    %13 = arith.mulf %11, %12 : vector<16x128xf32>
    %14 = arith.mulf %13, %13 : vector<16x128xf32>
    %cst_2 = arith.constant dense<0.000000e+00> : vector<16xf32>
    %15 = vector.multi_reduction <add>, %14, %cst_2 [1] : vector<16x128xf32> to vector<16xf32>
    %16 = vector.shape_cast %15 : vector<16xf32> to vector<16x1xf32>
    %cst_3 = arith.constant 3.125000e-02 : f32
    %17 = vector.broadcast %cst_3 : f32 to vector<16x1xf32>
    %18 = arith.mulf %16, %17 : vector<16x1xf32>
    %cst_4 = arith.constant 9.99999974E-6 : f32
    %19 = vector.broadcast %cst_4 : f32 to vector<16x1xf32>
    %20 = arith.addf %18, %19 : vector<16x1xf32>
    %21 = math.rsqrt %20 : vector<16x1xf32>
    %22 = vector.broadcast %21 : vector<16x1xf32> to vector<16x128xf32>
    %23 = arith.mulf %13, %22 : vector<16x128xf32>
    %c0_5 = arith.constant 0 : index
    %c0_6 = arith.constant 0 : index
    %24 = vector.load %arg2[%c0_5, %c0_6] : memref<1x128xf32, #tpu.memory_space<vmem>>, vector<1x128xf32>
    %25 = vector.broadcast %24 : vector<1x128xf32> to vector<16x128xf32>
    %26 = arith.mulf %23, %25 : vector<16x128xf32>
    %c0_7 = arith.constant 0 : index
    %c0_8 = arith.constant 0 : index
    %27 = vector.load %arg3[%c0_7, %c0_8] : memref<1x128xf32, #tpu.memory_space<vmem>>, vector<1x128xf32>
    %28 = vector.broadcast %27 : vector<1x128xf32> to vector<16x128xf32>
    %29 = arith.addf %26, %28 : vector<16x128xf32>
    %c0_9 = arith.constant 0 : index
    %c0_10 = arith.constant 0 : index
    %30 = vector.load %arg7[%c0_9, %c0_10] : memref<1x128xf32, #tpu.memory_space<vmem>>, vector<1x128xf32>
    %31 = vector.shape_cast %30 : vector<1x128xf32> to vector<1x128xf32>
    %32 = vector.broadcast %31 : vector<1x128xf32> to vector<16x128xf32>
    %c0_11 = arith.constant 0 : index
    %c0_12 = arith.constant 0 : index
    %33 = vector.load %arg9[%c0_11, %c0_12] : memref<16x128xf32, #tpu.memory_space<vmem>>, vector<16x128xf32>
    tpu.vector_store %arg9[%c0_11, %c0_12], %32 {strides = array<i32>} : memref<16x128xf32, #tpu.memory_space<vmem>>, vector<16x128xf32>,
    %c0_13 = arith.constant 0 : index
    %c0_14 = arith.constant 0 : index
    %34 = vector.load %arg4[%c0_13, %c0_14] : memref<128x128xf32, #tpu.memory_space<vmem>>, vector<128x128xf32>
    %cst_15 = arith.constant dense<0.000000e+00> : vector<16x128xf32>
    %35 = tpu.matmul %29, %34, %cst_15 {dimension_numbers = #tpu.dot_dimension_numbers<[1], [0], [0], [1], [0, 0, 1, 1], [], []>} : vector<16x128xf32>, vector<128x128xf32>, vector<16x128xf32> -> vector<16x128xf32>
    %c0_16 = arith.constant 0 : index
    %c0_17 = arith.constant 0 : index
    %36 = vector.load %arg5[%c0_16, %c0_17] : memref<1x128xf32, #tpu.memory_space<vmem>>, vector<1x128xf32>
    %37 = vector.broadcast %36 : vector<1x128xf32> to vector<16x128xf32>
    %38 = arith.addf %35, %37 : vector<16x128xf32>
    %cst_18 = arith.constant 5.000000e-01 : f32
    %39 = vector.broadcast %cst_18 : f32 to vector<16x128xf32>
    %40 = arith.mulf %39, %38 : vector<16x128xf32>
    %cst_19 = arith.constant 0.707106769 : f32
    %41 = vector.broadcast %cst_19 : f32 to vector<16x128xf32>
    %42 = arith.mulf %38, %41 : vector<16x128xf32>
    %43 = math.erf %42 : vector<16x128xf32>
    %cst_20 = arith.constant 1.000000e+00 : f32
    %44 = vector.broadcast %cst_20 : f32 to vector<16x128xf32>
    %45 = arith.addf %44, %43 : vector<16x128xf32>
    %46 = arith.mulf %40, %45 : vector<16x128xf32>
    %c0_21 = arith.constant 0 : index
    %c0_22 = arith.constant 0 : index
    %47 = vector.load %arg9[%c0_21, %c0_22] : memref<16x128xf32, #tpu.memory_space<vmem>>, vector<16x128xf32>
    %c0_23 = arith.constant 0 : index
    %c0_24 = arith.constant 0 : index
    %48 = vector.load %arg6[%c0_23, %c0_24] : memref<128x128xf32, #tpu.memory_space<vmem>>, vector<128x128xf32>
    %cst_25 = arith.constant dense<0.000000e+00> : vector<16x128xf32>
    %49 = tpu.matmul %46, %48, %cst_25 {dimension_numbers = #tpu.dot_dimension_numbers<[1], [0], [0], [1], [0, 0, 1, 1], [], []>} : vector<16x128xf32>, vector<128x128xf32>, vector<16x128xf32> -> vector<16x128xf32>
    %50 = arith.addf %47, %49 : vector<16x128xf32>
    %c0_26 = arith.constant 0 : index
    %c0_27 = arith.constant 0 : index
    %51 = vector.load %arg9[%c0_26, %c0_27] : memref<16x128xf32, #tpu.memory_space<vmem>>, vector<16x128xf32>
    tpu.vector_store %arg9[%c0_26, %c0_27], %50 {strides = array<i32>} : memref<16x128xf32, #tpu.memory_space<vmem>>, vector<16x128xf32>,
    %c0_28 = arith.constant 0 : index
    %c0_29 = arith.constant 0 : index
    %52 = vector.load %arg9[%c0_28, %c0_29] : memref<16x128xf32, #tpu.memory_space<vmem>>, vector<16x128xf32>
    %c0_30 = arith.constant 0 : index
    %c0_31 = arith.constant 0 : index
    %53 = vector.load %arg8[%c0_30, %c0_31] : memref<16x128xf32, #tpu.memory_space<vmem>>, vector<16x128xf32>
    tpu.vector_store %arg8[%c0_30, %c0_31], %52 {strides = array<i32>} : memref<16x128xf32, #tpu.memory_space<vmem>>, vector<16x128xf32>,
    return
  }
  func.func @transform_0(%arg0: i32) -> (i32, i32) {
    %c0_i32 = arith.constant 0 : i32
    %c0_i32_0 = arith.constant 0 : i32
    return %arg0, %c0_i32 : i32, i32
  }
  func.func @transform_1(%arg0: i32) -> (i32, i32) {
    %c0_i32 = arith.constant 0 : i32
    %c0_i32_0 = arith.constant 0 : i32
    %c0_i32_1 = arith.constant 0 : i32
    return %c0_i32, %c0_i32_0 : i32, i32
  }
  func.func @transform_2(%arg0: i32) -> (i32, i32) {
    %c0_i32 = arith.constant 0 : i32
    %c0_i32_0 = arith.constant 0 : i32
    %c0_i32_1 = arith.constant 0 : i32
    return %c0_i32, %c0_i32_0 : i32, i32
  }
  func.func @transform_3(%arg0: i32) -> (i32, i32) {
    %c0_i32 = arith.constant 0 : i32
    %c0_i32_0 = arith.constant 0 : i32
    %c0_i32_1 = arith.constant 0 : i32
    return %c0_i32, %c0_i32_0 : i32, i32
  }
  func.func @transform_4(%arg0: i32) -> (i32, i32) {
    %c0_i32 = arith.constant 0 : i32
    %c0_i32_0 = arith.constant 0 : i32
    %c0_i32_1 = arith.constant 0 : i32
    return %c0_i32, %c0_i32_0 : i32, i32
  }
  func.func @transform_5(%arg0: i32) -> (i32, i32) {
    %c0_i32 = arith.constant 0 : i32
    %c0_i32_0 = arith.constant 0 : i32
    %c0_i32_1 = arith.constant 0 : i32
    return %c0_i32, %c0_i32_0 : i32, i32
  }
  func.func @transform_6(%arg0: i32) -> (i32, i32) {
    %c0_i32 = arith.constant 0 : i32
    %c0_i32_0 = arith.constant 0 : i32
    %c0_i32_1 = arith.constant 0 : i32
    return %c0_i32, %c0_i32_0 : i32, i32
  }
  func.func @transform_7(%arg0: i32) -> (i32, i32) {
    %c0_i32 = arith.constant 0 : i32
    %c0_i32_0 = arith.constant 0 : i32
    return %arg0, %c0_i32 : i32, i32
  }
}

</mosaic_0001>

<llo_original>
// kernel: tpu_custom_call.1
$region0: #{tpu_custom_call.1}
  #allocation0 [shape = 'u32[]', space=smem, size = 0x4, offset = 0x4, fixed_abs, tag = 'smem constant byte address 0x4 - core index']
  #allocation1 [shape = 'u32[144,128]{1,0:T(1,128)}', space=vmem, size = 0x12000, scoped, tag = 'internal scratch']
  #allocation2 [shape = 'f32[16,128]{1,0:T(8,128)}', space=vmem, size = 0x2000, scoped, tag = 'scratch operand']
  %s0 = inlined_call_operand.hbm [shape: f32[16,128], index: 0, kind: input, shape index: {}]
  %s1 = inlined_call_operand.vmem [shape: f32[1,128], index: 1, kind: input, shape index: {}]
  %s2 = inlined_call_operand.vmem [shape: f32[1,128], index: 2, kind: input, shape index: {}]
  %s3 = inlined_call_operand.hbm [shape: f32[128,128], index: 3, kind: input, shape index: {}]
  %s4 = inlined_call_operand.vmem [shape: f32[1,128], index: 4, kind: input, shape index: {}]
  %s5 = inlined_call_operand.hbm [shape: f32[128,128], index: 5, kind: input, shape index: {}]
  %s6 = inlined_call_operand.vmem [shape: f32[1,128], index: 6, kind: input, shape index: {}]
  %s7 = inlined_call_operand.hbm [shape: f32[16,128], index: 7, kind: output, shape index: {}]
  %s8 = sld [smem:[#allocation0]]
  $region50: #{tpu_custom_call.1} parent=0
    _
  %s10 = ssub.s32 1, %s8
  %s11 = scalar_select 0, %s10, %s8
  $region1: #{tpu_custom_call.1} parent=0
    #allocation3 [shape = 'u8[8192]{0}', space=vmem, size = 0x2000, scoped, tag = 'input window, operand 0, single buffered']
    #allocation4 [shape = 's32[1]{0}', space=sflag, size = 0x4, scoped, tag = 'scoped memory for tpu_custom_call.1']
    #allocation5 [shape = 's32[1]{0}', space=sflag, size = 0x4, scoped, tag = 'scoped memory for tpu_custom_call.1']
    #allocation6 [shape = 'u8[65536]{0}', space=vmem, size = 0x10000, scoped, tag = 'input window, operand 3, single buffered']
    #allocation7 [shape = 's32[1]{0}', space=sflag, size = 0x4, scoped, tag = 'scoped memory for tpu_custom_call.1']
    #allocation8 [shape = 'u8[65536]{0}', space=vmem, size = 0x10000, scoped, tag = 'input window, operand 5, single buffered']
    #allocation9 [shape = 'u8[8192]{0}', space=vmem, size = 0x2000, scoped, tag = 'output window, operand 0, single buffered']
    %12 = vsyncpa [#allocation4], 0
    %13 = vsyncpa [#allocation7], 0
    %14 = vsyncpa [#allocation5], 0
    // Predicated region
    $region2: #{tpu_custom_call.1} parent=1 // pred_check
      _
    $region3: #{tpu_custom_call.1} parent=1 // pred_check_branch
      %16 = sbr.rel (0) target = $region5
    $region4: #{tpu_custom_call.1} parent=1 // pred_region
      %s18 = ssub.s32 256, 256
      %19 = vsyncadd [#allocation4], %s18
      %s20 = sshll.u32 [#allocation3], 4
      %s21 = int_to_ptr.vmem [resolvable:$true] %s20
      %26 = dma.hbm_to_vmem [thread:$0]  %s0, 256, %s21, [#allocation4], 128, 128, 8
    $region5: #{tpu_custom_call.1} parent=1 // pred_fallthru
      _
    // Predicated region
    $region6: #{tpu_custom_call.1} parent=1 // pred_check
      _
    $region7: #{tpu_custom_call.1} parent=1 // pred_check_branch
      %28 = sbr.rel (0) target = $region9
    $region8: #{tpu_custom_call.1} parent=1 // pred_region
      _
    $region9: #{tpu_custom_call.1} parent=1 // pred_fallthru
      _
    // Predicated region
    $region10: #{tpu_custom_call.1} parent=1 // pred_check
      _
    $region11: #{tpu_custom_call.1} parent=1 // pred_check_branch
      %30 = sbr.rel (0) target = $region13
    $region12: #{tpu_custom_call.1} parent=1 // pred_region
      _
    $region13: #{tpu_custom_call.1} parent=1 // pred_fallthru
      _
    // Predicated region
    $region14: #{tpu_custom_call.1} parent=1 // pred_check
      _
    $region15: #{tpu_custom_call.1} parent=1 // pred_check_branch
      %32 = sbr.rel (0) target = $region17
    $region16: #{tpu_custom_call.1} parent=1 // pred_region
      %s34 = ssub.s32 2048, 2048
      %35 = vsyncadd [#allocation7], %s34
      %s36 = sshll.u32 [#allocation6], 4
      %s37 = int_to_ptr.vmem [resolvable:$true] %s36
      %42 = dma.hbm_to_vmem [thread:$0]  %s3, 2048, %s37, [#allocation7], 128, 128, 8
    $region17: #{tpu_custom_call.1} parent=1 // pred_fallthru
      _
    // Predicated region
    $region18: #{tpu_custom_call.1} parent=1 // pred_check
      _
    $region19: #{tpu_custom_call.1} parent=1 // pred_check_branch
      %44 = sbr.rel (0) target = $region21
    $region20: #{tpu_custom_call.1} parent=1 // pred_region
      _
    $region21: #{tpu_custom_call.1} parent=1 // pred_fallthru
      _
    // Predicated region
    $region22: #{tpu_custom_call.1} parent=1 // pred_check
      _
    $region23: #{tpu_custom_call.1} parent=1 // pred_check_branch
      %46 = sbr.rel (0) target = $region25
    $region24: #{tpu_custom_call.1} parent=1 // pred_region
      %s48 = ssub.s32 2048, 2048
      %49 = vsyncadd [#allocation7], %s48
      %s50 = sshll.u32 [#allocation8], 4
      %s51 = int_to_ptr.vmem [resolvable:$true] %s50
      %56 = dma.hbm_to_vmem [thread:$0]  %s5, 2048, %s51, [#allocation7], 128, 128, 8
    $region25: #{tpu_custom_call.1} parent=1 // pred_fallthru
      _
    // Predicated region
    $region26: #{tpu_custom_call.1} parent=1 // pred_check
      _
    $region27: #{tpu_custom_call.1} parent=1 // pred_check_branch
      %58 = sbr.rel (0) target = $region29
    $region28: #{tpu_custom_call.1} parent=1 // pred_region
      _
    $region29: #{tpu_custom_call.1} parent=1 // pred_fallthru
      _
    // Predicated region
    $region30: #{tpu_custom_call.1} parent=1 // pred_check
      _
    $region31: #{tpu_custom_call.1} parent=1 // pred_check_branch
      %60 = sbr.rel (0) target = $region33
    $region32: #{tpu_custom_call.1} parent=1 // pred_region
      %61 = dma.done [#allocation4], 256
    $region33: #{tpu_custom_call.1} parent=1 // pred_fallthru
      _
    // Predicated region
    $region34: #{tpu_custom_call.1} parent=1 // pred_check
      _
    $region35: #{tpu_custom_call.1} parent=1 // pred_check_branch
      %63 = sbr.rel (0) target = $region37
    $region36: #{tpu_custom_call.1} parent=1 // pred_region
      %64 = dma.done [#allocation7], 2048
    $region37: #{tpu_custom_call.1} parent=1 // pred_fallthru
      _
    // Predicated region
    $region38: #{tpu_custom_call.1} parent=1 // pred_check
      _
    $region39: #{tpu_custom_call.1} parent=1 // pred_check_branch
      %66 = sbr.rel (0) target = $region41
    $region40: #{tpu_custom_call.1} parent=1 // pred_region
      %67 = dma.done [#allocation7], 2048
    $region41: #{tpu_custom_call.1} parent=1 // pred_fallthru
      _
    %v68 = vld [vmem:[#allocation3] sm:$0xff]
    %v69 = vld [vmem:[#allocation3 + $0x8] sm:$0xff]
    %v70 = vlaneseq
    %v71 = vand.u32 %v70, 127
    %vm72 = vcmp.lt.s32.totalorder %v71, 32
    %v73 = vsel %vm72, 1, 0
    %v74 = vcvt.s32.f32 %v73
    %75 = vadd.xlane.f32.xlu0 %v68
    %v76 = vpop.xlane.xlu0 %75
    %77 = vadd.xlane.f32.xlu0 %v69
    %v78 = vpop.xlane.xlu0 %77
    %v79 = vmul.f32 %v76, 0.03125
    %v80 = vmul.f32 %v78, 0.03125
    %v81 = vsub.f32 %v68, %v79
    %v82 = vsub.f32 %v69, %v80
    %v83 = vmul.f32 %v81, %v74
    %v84 = vmul.f32 %v82, %v74
    %v85 = vmul.f32 %v83, %v83
    %v86 = vmul.f32 %v84, %v84
    %87 = vadd.xlane.f32.xlu0 %v85
    %v88 = vpop.xlane.xlu0 %87
    %89 = vadd.xlane.f32.xlu0 %v86
    %v90 = vpop.xlane.xlu0 %89
    %v91 = vmul.f32 %v88, 0.03125
    %v92 = vmul.f32 %v90, 0.03125
    %v93 = vadd.f32 %v91, 1e-05
    %v94 = vadd.f32 %v92, 1e-05
    %v95 = vrsqrt.pop %v93
    %v96 = vrsqrt.pop %v94
    %v97 = vmul.f32 %v83, %v95
    %v98 = vmul.f32 %v84, %v96
    %v99 = vld [vmem:[%s1] sm:$0x1]
    %v101 = vlaneseq
    %v102 = vshrl.u32 %v101, 7
    %v103 = vsub.s32 0, %v102
    %v104 = vrot.slane %v99, %v103
    %v106 = vmul.f32 %v97, %v104
    %v107 = vmul.f32 %v98, %v104
    %v108 = vld [vmem:[%s2] sm:$0x1]
    %v110 = vlaneseq
    %v111 = vshrl.u32 %v110, 7
    %v112 = vsub.s32 0, %v111
    %v113 = vrot.slane %v108, %v112
    %v115 = vadd.f32 %v106, %v113
    %v116 = vadd.f32 %v107, %v113
    %v117 = vld [vmem:[%s6] sm:$0x1]
    %v119 = vlaneseq
    %v120 = vshrl.u32 %v119, 7
    %v121 = vsub.s32 0, %v120
    %v122 = vrot.slane %v117, %v121
    %124 = vst [vmem:[#allocation2] sm:$0xff] %v122
    %125 = vst [vmem:[#allocation2 + $0x8] sm:$0xff] %v122
    %v126 = vld [vmem:[#allocation6] sm:$0xff]
    %v127 = vld [vmem:[#allocation6 + $0x8] sm:$0xff]
    %v128 = vld [vmem:[#allocation6 + $0x10] sm:$0xff]
    %v129 = vld [vmem:[#allocation6 + $0x18] sm:$0xff]
    %v130 = vld [vmem:[#allocation6 + $0x20] sm:$0xff]
    %v131 = vld [vmem:[#allocation6 + $0x28] sm:$0xff]
    %v132 = vld [vmem:[#allocation6 + $0x30] sm:$0xff]
    %v133 = vld [vmem:[#allocation6 + $0x38] sm:$0xff]
    %v134 = vld [vmem:[#allocation6 + $0x40] sm:$0xff]
    %v135 = vld [vmem:[#allocation6 + $0x48] sm:$0xff]
    %v136 = vld [vmem:[#allocation6 + $0x50] sm:$0xff]
    %v137 = vld [vmem:[#allocation6 + $0x58] sm:$0xff]
    %v138 = vld [vmem:[#allocation6 + $0x60] sm:$0xff]
    %v139 = vld [vmem:[#allocation6 + $0x68] sm:$0xff]
    %v140 = vld [vmem:[#allocation6 + $0x70] sm:$0xff]
    %v141 = vld [vmem:[#allocation6 + $0x78] sm:$0xff]
    %v142 = vld [vmem:[%s4] sm:$0x1]
    %v144 = vlaneseq
    %v145 = vshrl.u32 %v144, 7
    %v146 = vsub.s32 0, %v145
    %v147 = vrot.slane %v142, %v146
    %149 = vmatprep.subr.mxu0 0.0
    %150 = vmatpush1.msra.mxu0 %v126
    %151 = vmatprep.subr.mxu0 0.0
    %152 = vmatpush1.msra.mxu0 %v127
    %153 = vmatprep.subr.mxu0 0.0
    %154 = vmatpush1.msra.mxu0 %v128
    %155 = vmatprep.subr.mxu0 0.0
    %156 = vmatpush1.msra.mxu0 %v129
    %157 = vmatprep.subr.mxu0 0.0
    %158 = vmatpush1.msra.mxu0 %v130
    %159 = vmatprep.subr.mxu0 0.0
    %160 = vmatpush1.msra.mxu0 %v131
    %161 = vmatprep.subr.mxu0 0.0
    %162 = vmatpush1.msra.mxu0 %v132
    %163 = vmatprep.subr.mxu0 0.0
    %164 = vmatpush1.msra.mxu0 %v133
    %165 = vmatprep.subr.mxu0 0.0
    %166 = vmatpush1.msra.mxu0 %v134
    %167 = vmatprep.subr.mxu0 0.0
    %168 = vmatpush1.msra.mxu0 %v135
    %169 = vmatprep.subr.mxu0 0.0
    %170 = vmatpush1.msra.mxu0 %v136
    %171 = vmatprep.subr.mxu0 0.0
    %172 = vmatpush1.msra.mxu0 %v137
    %173 = vmatprep.subr.mxu0 0.0
    %174 = vmatpush1.msra.mxu0 %v138
    %175 = vmatprep.subr.mxu0 0.0
    %176 = vmatpush1.msra.mxu0 %v139
    %177 = vmatprep.subr.mxu0 0.0
    %178 = vmatpush1.msra.mxu0 %v140
    %179 = vmatprep.subr.mxu0 0.0
    %180 = vmatpush1.msra.mxu0 %v141
    %181 = vmatprep.subr.mxu0 0.0
    %182 = vmatpush1.msra.mxu0 0.0
    %183 = vmatprep.subr.mxu0 0.0
    %184 = vmatpush1.msra.mxu0 0.0
    %185 = vmatprep.subr.mxu0 0.0
    %186 = vmatpush1.msra.mxu0 0.0
    %187 = vmatprep.subr.mxu0 0.0
    %188 = vmatpush1.msra.mxu0 0.0
    %189 = vmatprep.subr.mxu0 0.0
    %190 = vmatpush1.msra.mxu0 0.0
    %191 = vmatprep.subr.mxu0 0.0
    %192 = vmatpush1.msra.mxu0 0.0
    %193 = vmatprep.subr.mxu0 0.0
    %194 = vmatpush1.msra.mxu0 0.0
    %195 = vmatprep.subr.mxu0 0.0
    %196 = vmatpush1.msra.mxu0 0.0
    %197 = vmatprep.subr.mxu0 0.0
    %198 = vmatpush1.msra.mxu0 0.0
    %199 = vmatprep.subr.mxu0 0.0
    %200 = vmatpush1.msra.mxu0 0.0
    %201 = vmatprep.subr.mxu0 0.0
    %202 = vmatpush1.msra.mxu0 0.0
    %203 = vmatprep.subr.mxu0 0.0
    %204 = vmatpush1.msra.mxu0 0.0
    %205 = vmatprep.subr.mxu0 0.0
    %206 = vmatpush1.msra.mxu0 0.0
    %207 = vmatprep.subr.mxu0 0.0
    %208 = vmatpush1.msra.mxu0 0.0
    %209 = vmatprep.subr.mxu0 0.0
    %210 = vmatpush1.msra.mxu0 0.0
    %211 = vmatprep.subr.mxu0 0.0
    %212 = vmatpush1.msra.mxu0 0.0
    %213 = vmatprep.mubr.f32.mxu0 0.0
    %214 = vmatmul.mubr.f32.gmra.mrb[0].mxu0 %v115
    %v215 = vpop.f32.mrb[0].mxu0
    %v216 = vadd.f32 %v147, %v215
    %v217 = vpop.f32.mrb[0].mxu0
    %218 = vmatprep.mubr.f32.mxu0 0.0
    %219 = vmatmul.mubr.f32.gmra.mrb[0].mxu0 %v116
    %v220 = vpop.f32.mrb[0].mxu0
    %v221 = vadd.f32 %v147, %v220
    %v222 = vpop.f32.mrb[0].mxu0
    %223 = vdwg.mxu0
    %v224 = vmul.f32 %v216, 0.5
    %v225 = vmul.f32 %v221, 0.5
    %v226 = vmul.f32 %v216, 0.70710677
    %v227 = vmul.f32 %v221, 0.70710677
    %v228 = verf.f32.pop %v226
    %v229 = verf.f32.pop %v227
    %v230 = vadd.f32 %v228, 1.0
    %v231 = vadd.f32 %v229, 1.0
    %v232 = vmul.f32 %v224, %v230
    %v233 = vmul.f32 %v225, %v231
    %v234 = vld [vmem:[#allocation2] sm:$0xff]
    %v235 = vld [vmem:[#allocation2 + $0x8] sm:$0xff]
    %v236 = vld [vmem:[#allocation8] sm:$0xff]
    %v237 = vld [vmem:[#allocation8 + $0x8] sm:$0xff]
    %v238 = vld [vmem:[#allocation8 + $0x10] sm:$0xff]
    %v239 = vld [vmem:[#allocation8 + $0x18] sm:$0xff]
    %v240 = vld [vmem:[#allocation8 + $0x20] sm:$0xff]
    %v241 = vld [vmem:[#allocation8 + $0x28] sm:$0xff]
    %v242 = vld [vmem:[#allocation8 + $0x30] sm:$0xff]
    %v243 = vld [vmem:[#allocation8 + $0x38] sm:$0xff]
    %v244 = vld [vmem:[#allocation8 + $0x40] sm:$0xff]
    %v245 = vld [vmem:[#allocation8 + $0x48] sm:$0xff]
    %v246 = vld [vmem:[#allocation8 + $0x50] sm:$0xff]
    %v247 = vld [vmem:[#allocation8 + $0x58] sm:$0xff]
    %v248 = vld [vmem:[#allocation8 + $0x60] sm:$0xff]
    %v249 = vld [vmem:[#allocation8 + $0x68] sm:$0xff]
    %v250 = vld [vmem:[#allocation8 + $0x70] sm:$0xff]
    %v251 = vld [vmem:[#allocation8 + $0x78] sm:$0xff]
    %252 = vmatprep.subr.mxu0 0.0
    %253 = vmatpush1.msra.mxu0 %v236
    %254 = vmatprep.subr.mxu0 0.0
    %255 = vmatpush1.msra.mxu0 %v237
    %256 = vmatprep.subr.mxu0 0.0
    %257 = vmatpush1.msra.mxu0 %v238
    %258 = vmatprep.subr.mxu0 0.0
    %259 = vmatpush1.msra.mxu0 %v239
    %260 = vmatprep.subr.mxu0 0.0
    %261 = vmatpush1.msra.mxu0 %v240
    %262 = vmatprep.subr.mxu0 0.0
    %263 = vmatpush1.msra.mxu0 %v241
    %264 = vmatprep.subr.mxu0 0.0
    %265 = vmatpush1.msra.mxu0 %v242
    %266 = vmatprep.subr.mxu0 0.0
    %267 = vmatpush1.msra.mxu0 %v243
    %268 = vmatprep.subr.mxu0 0.0
    %269 = vmatpush1.msra.mxu0 %v244
    %270 = vmatprep.subr.mxu0 0.0
    %271 = vmatpush1.msra.mxu0 %v245
    %272 = vmatprep.subr.mxu0 0.0
    %273 = vmatpush1.msra.mxu0 %v246
    %274 = vmatprep.subr.mxu0 0.0
    %275 = vmatpush1.msra.mxu0 %v247
    %276 = vmatprep.subr.mxu0 0.0
    %277 = vmatpush1.msra.mxu0 %v248
    %278 = vmatprep.subr.mxu0 0.0
    %279 = vmatpush1.msra.mxu0 %v249
    %280 = vmatprep.subr.mxu0 0.0
    %281 = vmatpush1.msra.mxu0 %v250
    %282 = vmatprep.subr.mxu0 0.0
    %283 = vmatpush1.msra.mxu0 %v251
    %284 = vmatprep.subr.mxu0 0.0
    %285 = vmatpush1.msra.mxu0 0.0
    %286 = vmatprep.subr.mxu0 0.0
    %287 = vmatpush1.msra.mxu0 0.0
    %288 = vmatprep.subr.mxu0 0.0
    %289 = vmatpush1.msra.mxu0 0.0
    %290 = vmatprep.subr.mxu0 0.0
    %291 = vmatpush1.msra.mxu0 0.0
    %292 = vmatprep.subr.mxu0 0.0
    %293 = vmatpush1.msra.mxu0 0.0
    %294 = vmatprep.subr.mxu0 0.0
    %295 = vmatpush1.msra.mxu0 0.0
    %296 = vmatprep.subr.mxu0 0.0
    %297 = vmatpush1.msra.mxu0 0.0
    %298 = vmatprep.subr.mxu0 0.0
    %299 = vmatpush1.msra.mxu0 0.0
    %300 = vmatprep.subr.mxu0 0.0
    %301 = vmatpush1.msra.mxu0 0.0
    %302 = vmatprep.subr.mxu0 0.0
    %303 = vmatpush1.msra.mxu0 0.0
    %304 = vmatprep.subr.mxu0 0.0
    %305 = vmatpush1.msra.mxu0 0.0
    %306 = vmatprep.subr.mxu0 0.0
    %307 = vmatpush1.msra.mxu0 0.0
    %308 = vmatprep.subr.mxu0 0.0
    %309 = vmatpush1.msra.mxu0 0.0
    %310 = vmatprep.subr.mxu0 0.0
    %311 = vmatpush1.msra.mxu0 0.0
    %312 = vmatprep.subr.mxu0 0.0
    %313 = vmatpush1.msra.mxu0 0.0
    %314 = vmatprep.subr.mxu0 0.0
    %315 = vmatpush1.msra.mxu0 0.0
    %316 = vmatprep.mubr.f32.mxu0 0.0
    %317 = vmatmul.mubr.f32.gmra.mrb[0].mxu0 %v232
    %v318 = vpop.f32.mrb[0].mxu0
    %v319 = vadd.f32 0.0, %v318
    %v320 = vpop.f32.mrb[0].mxu0
    %321 = vmatprep.mubr.f32.mxu0 0.0
    %322 = vmatmul.mubr.f32.gmra.mrb[0].mxu0 %v233
    %v323 = vpop.f32.mrb[0].mxu0
    %v324 = vadd.f32 0.0, %v323
    %v325 = vpop.f32.mrb[0].mxu0
    %326 = vdwg.mxu0
    %v327 = vadd.f32 %v234, %v319
    %v328 = vadd.f32 %v235, %v324
    %329 = vst [vmem:[#allocation2] sm:$0xff] %v327
    %330 = vst [vmem:[#allocation2 + $0x8] sm:$0xff] %v328
    %v331 = vld [vmem:[#allocation2] sm:$0xff]
    %v332 = vld [vmem:[#allocation2 + $0x8] sm:$0xff]
    %333 = vst [vmem:[#allocation9] sm:$0xff] %v331
    %334 = vst [vmem:[#allocation9 + $0x8] sm:$0xff] %v332
    // Predicated region
    $region42: #{tpu_custom_call.1} parent=1 // pred_check
      _
    $region43: #{tpu_custom_call.1} parent=1 // pred_check_branch
      %336 = sbr.rel (0) target = $region45
    $region44: #{tpu_custom_call.1} parent=1 // pred_region
      %s338 = ssub.s32 256, 256
      %339 = vsyncadd [#allocation5], %s338
      %s340 = sshll.u32 [#allocation9], 4
      %s341 = int_to_ptr.vmem [resolvable:$true] %s340
      %346 = dma.vmem_to_hbm [thread:$0]  %s341, 256, %s7, [#allocation5], 128, 128, 8
    $region45: #{tpu_custom_call.1} parent=1 // pred_fallthru
      _
    // Predicated region
    $region46: #{tpu_custom_call.1} parent=1 // pred_check
      _
    $region47: #{tpu_custom_call.1} parent=1 // pred_check_branch
      %348 = sbr.rel (0) target = $region49
    $region48: #{tpu_custom_call.1} parent=1 // pred_region
      %349 = dma.done [#allocation5], 256
    $region49: #{tpu_custom_call.1} parent=1 // pred_fallthru
      _
    %350 = vsyncpa [#allocation4], 1
    %351 = vsyncpa [#allocation7], 1
    %352 = vsyncpa [#allocation5], 1

</llo_original>
